<compile_context>
chip_gen: v6e
topology: v6e:2x2x1
jax: 0.10.0
libtpu: 0.0.40
codegen_flags: <defaults>
</compile_context>

<pallas_src>
import jax
import jax.numpy as jnp
from jax.experimental import pallas as pl
from jax.experimental.pallas import tpu as pltpu


def _cnn_kernel(im1_ref, w1_ref, p1_ref, pmat_ref, w2_ref, p2_ref, o_ref):
    f32 = jnp.float32
    bf16 = jnp.bfloat16
    eps = 1e-5
    k2 = pmat_ref.shape[0]
    l3 = pmat_ref.shape[3]

    def relu_bn(z, gamma, beta):
        # ReLU then training-mode BatchNorm1d (biased variance over batch*length),
        # one-pass sum / sum-of-squares statistics, all in f32.
        a = jnp.maximum(z, 0.0)
        inv_n = 1.0 / (a.shape[0] * a.shape[2])
        s = jnp.sum(jnp.sum(a, axis=2, keepdims=True), axis=0, keepdims=True)
        ss = jnp.sum(jnp.sum(a * a, axis=2, keepdims=True), axis=0, keepdims=True)
        mean = s * inv_n
        var = ss * inv_n - mean * mean
        return (a - mean) * (jax.lax.rsqrt(var + eps) * gamma) + beta

    # ---- Stage 1: Conv1 (im2col'd in the wrapper) -> ReLU -> BN1 ---------------------
    b1 = p1_ref[:, 0:1]                                   # (C1, 1)
    g1 = p1_ref[:, 1:2]
    be1 = p1_ref[:, 2:3]
    z1 = jnp.einsum('ncr,nrl->ncl', w1_ref[...], im1_ref[...],
                    preferred_element_type=f32) + b1      # (N, C1, L1) f32
    a1 = relu_bn(z1, g1, be1)
    a1b = a1.astype(bf16)

    # ---- Stage 2: AvgPool1d(5,3) fused with Conv2 taps, accumulated (no concatenate) -
    b2 = p2_ref[:, 0:1]                                   # (C2, 1)
    g2 = p2_ref[:, 1:2]
    be2 = p2_ref[:, 2:3]
    acc = None
    for t in range(k2):
        pooled = jnp.einsum('ncr,nrl->ncl', a1b, pmat_ref[t],
                            preferred_element_type=f32)   # (N, C1, L3)
        part = jnp.einsum('ndc,ncl->ndl', w2_ref[t], pooled.astype(bf16),
                          preferred_element_type=f32)     # (N, C2, L3)
        acc = part if acc is None else acc + part
    a2 = relu_bn(acc + b2, g2, be2)                       # (N, C2, L3) f32

    # ---- AdaptiveAvgPool1d(1) + Linear as VPU/XLU reductions (no 1-lane MXU matmul) --
    wl = p2_ref[:, 3:4]                                   # (C2, 1) linear weight
    bl = p2_ref[0:1, 4:5]                                 # (1, 1)  linear bias
    feat = jnp.sum(a2, axis=2, keepdims=True) * (1.0 / l3)        # (N, C2, 1)
    o_ref[...] = jnp.sum(feat * wl, axis=1, keepdims=True) + bl   # (N, 1, 1)


def cnn_forward(x, w1, b1, g1, be1, w2, b2, g2, be2, wl, bl, *, stride=1, dilation=1):
    """x: (N, Cin, L0) NCL; conv weights in PyTorch layout (Cout, Cin, K)."""
    N, Cin, L0 = x.shape
    C1, _, K1 = w1.shape
    C2, _, K2 = w2.shape
    L1 = (L0 - dilation * (K1 - 1) - 1) // stride + 1
    L2 = (L1 - 5) // 3 + 1
    L3 = (L2 - dilation * (K2 - 1) - 1) // stride + 1
    assert L1 > 0 and L2 > 0 and L3 > 0

    f32, bf16 = jnp.float32, jnp.bfloat16
    xf = x.astype(f32)

    # Conv1 im2col (pure layout work, done once in XLA), length kept on the last (lane) axis:
    #   im1[n, t*Cin + cin, l] = x[n, cin, l*stride + t*dilation]    -> (N, K1*Cin, L1)
    cols = [xf[:, :, t * dilation: t * dilation + (L1 - 1) * stride + 1: stride]
            for t in range(K1)]
    im1 = jnp.concatenate(cols, axis=1).astype(bf16)

    # Conv1 weight flattened to (C1, K1*Cin) matching im1's row order; broadcast over batch so
    # the kernel only runs canonical leading-batch-dim MXU matmuls (O(N) work, batch-shared op).
    w1_mat = jnp.transpose(w1, (0, 2, 1)).reshape(C1, K1 * Cin)
    w1_b = jnp.broadcast_to(w1_mat[None].astype(bf16), (N, C1, K1 * Cin))

    # Batch-shared pool+tap selection matrices, one per Conv2 tap:
    #   P[t, r, l] = 1/5  iff  3*(l*stride + t*dilation) <= r < 3*(l*stride + t*dilation) + 5
    r_idx = jnp.arange(L1, dtype=jnp.int32)[:, None]
    l_idx = jnp.arange(L3, dtype=jnp.int32)[None, :]
    p_list = []
    for t in range(K2):
        m0 = 3 * (l_idx * stride + t * dilation)
        p_list.append(((r_idx >= m0) & (r_idx < m0 + 5)).astype(f32) / 5.0)
    pmat = jnp.stack(p_list, axis=0)                                    # (K2, L1, L3)
    pmat_b = jnp.broadcast_to(pmat[:, None].astype(bf16), (K2, N, L1, L3))

    # Conv2 weights per tap, (K2, C2, C1), broadcast over batch.
    w2_mat = jnp.transpose(w2, (2, 0, 1))                               # (K2, C2, C1)
    w2_b = jnp.broadcast_to(w2_mat[:, None].astype(bf16), (K2, N, C2, C1))

    # Packed per-channel parameters (cuts DMA descriptor / input count to 6).
    p1 = jnp.stack([b1, g1, be1], axis=1).astype(f32)                   # (C1, 3)
    bl_col = jnp.zeros((C2,), f32).at[0].set(bl.astype(f32)[0])
    p2 = jnp.stack([b2, g2, be2, wl.reshape(-1), bl_col], axis=1).astype(f32)   # (C2, 5)

    args = (im1, w1_b, p1, pmat_b, w2_b, p2)
    vmem = pltpu.MemorySpace.VMEM
    out = pl.pallas_call(
        _cnn_kernel,
        out_shape=jax.ShapeDtypeStruct((N, 1, 1), f32),
        in_specs=[pl.BlockSpec(memory_space=vmem) for _ in args],
        out_specs=pl.BlockSpec(memory_space=vmem),
        # TODO(synk): at production batch/length sizes, tile the length axis over a
        # "parallel" grid (v7x dual-TC) with partial BN sum/sumsq accumulators and an
        # explicit vmem_limit; unnecessary here (whole problem fits in ~60 KiB of VMEM).
    )(*args)
    return out.reshape(N, 1)


def _ref_forward(x, w1, b1, g1, be1, w2, b2, g2, be2, wl, bl, *, stride, dilation):
    def conv1d(a, w, b):
        out = jax.lax.conv_general_dilated(
            a, w, window_strides=(stride,), padding="VALID",
            rhs_dilation=(dilation,), dimension_numbers=("NCH", "OIH", "NCH"))
        return out + b[None, :, None]

    def bn(a, g, be):
        mean = a.mean(axis=(0, 2), keepdims=True)
        var = ((a - mean) ** 2).mean(axis=(0, 2), keepdims=True)
        return (a - mean) / jnp.sqrt(var + 1e-5) * g[None, :, None] + be[None, :, None]

    a = bn(jax.nn.relu(conv1d(x, w1, b1)), g1, be1)
    L1 = a.shape[2]
    L2 = (L1 - 5) // 3 + 1
    a = jnp.stack([a[:, :, 3 * m:3 * m + 5].mean(axis=2) for m in range(L2)], axis=2)
    a = bn(jax.nn.relu(conv1d(a, w2, b2)), g2, be2)
    a = a.mean(axis=2)                                        # AdaptiveAvgPool1d(1)
    return a @ wl.T + bl[None, :]                             # (N, 1)


if __name__ == "__main__":
    key = jax.random.PRNGKey(0)
    N, Cin, L0 = 2, 4, 64
    Cout, K1, stride, dilation = 8, 5, 1, 1
    C2 = 2 * Cout

    ks = jax.random.split(key, 7)
    x = jax.random.normal(ks[0], (N, Cin, L0), jnp.float32)
    w1 = jax.random.normal(ks[1], (Cout, Cin, K1), jnp.float32) * 0.2
    b1 = jax.random.normal(ks[2], (Cout,), jnp.float32) * 0.1
    w2 = jax.random.normal(ks[3], (C2, Cout, 3), jnp.float32) * 0.2
    b2 = jax.random.normal(ks[4], (C2,), jnp.float32) * 0.1
    wl = jax.random.normal(ks[5], (1, C2), jnp.float32) * 0.2
    bl = jax.random.normal(ks[6], (1,), jnp.float32) * 0.1
    g1, be1 = jnp.ones((Cout,), jnp.float32), jnp.zeros((Cout,), jnp.float32)
    g2, be2 = jnp.ones((C2,), jnp.float32), jnp.zeros((C2,), jnp.float32)

    out = cnn_forward(x, w1, b1, g1, be1, w2, b2, g2, be2, wl, bl,
                      stride=stride, dilation=dilation)
    out = jax.block_until_ready(out)
    assert out.shape == (N, 1), out.shape

    ref = _ref_forward(x, w1, b1, g1, be1, w2, b2, g2, be2, wl, bl,
                       stride=stride, dilation=dilation)
    # bf16 MXU operands (f32 accumulation) vs. an all-f32 reference: tolerance sized for
    # bf16 matmul rounding; real bugs (wrong pooling/BN/layout) would exceed this by >10x.
    assert jnp.allclose(out, ref, atol=3e-2, rtol=3e-2), (out, ref)

    print("KERNEL_OK")
</pallas_src>

<mosaic_0001>
module attributes {stable_mosaic.version = 11 : i64} {
  func.func @_cnn_kernel(%arg0: memref<2x20x60xbf16, #tpu.memory_space<vmem>>, %arg1: memref<2x8x20xbf16, #tpu.memory_space<vmem>>, %arg2: memref<8x3xf32, #tpu.memory_space<vmem>>, %arg3: memref<3x2x60x17xbf16, #tpu.memory_space<vmem>>, %arg4: memref<3x2x16x8xbf16, #tpu.memory_space<vmem>>, %arg5: memref<16x5xf32, #tpu.memory_space<vmem>>, %arg6: memref<2x1x1xf32, #tpu.memory_space<vmem>>) attributes {dimension_semantics = [], scalar_prefetch = 0 : i64, scratch_operands = 0 : i64, tpu.core_type = #tpu.core_type<tc>} {
    %c0 = arith.constant 0 : index
    %c0_0 = arith.constant 0 : index
    %0 = vector.load %arg2[%c0, %c0_0] : memref<8x3xf32, #tpu.memory_space<vmem>>, vector<8x1xf32>
    %c0_1 = arith.constant 0 : index
    %c1 = arith.constant 1 : index
    %1 = vector.load %arg2[%c0_1, %c1] : memref<8x3xf32, #tpu.memory_space<vmem>>, vector<8x1xf32>
    %c0_2 = arith.constant 0 : index
    %c2 = arith.constant 2 : index
    %2 = vector.load %arg2[%c0_2, %c2] : memref<8x3xf32, #tpu.memory_space<vmem>>, vector<8x1xf32>
    %c0_3 = arith.constant 0 : index
    %c0_4 = arith.constant 0 : index
    %c0_5 = arith.constant 0 : index
    %3 = vector.load %arg1[%c0_3, %c0_4, %c0_5] : memref<2x8x20xbf16, #tpu.memory_space<vmem>>, vector<2x8x20xbf16>
    %c0_6 = arith.constant 0 : index
    %c0_7 = arith.constant 0 : index
    %c0_8 = arith.constant 0 : index
    %4 = vector.load %arg0[%c0_6, %c0_7, %c0_8] : memref<2x20x60xbf16, #tpu.memory_space<vmem>>, vector<2x20x60xbf16>
    "tpu.trace_start"() <{level = 10 : i32, message = "ncr,nrl->ncl"}> : () -> ()
    %cst = arith.constant dense<0.000000e+00> : vector<2x8x60xf32>
    %5 = tpu.matmul %3, %4, %cst {dimension_numbers = #tpu.dot_dimension_numbers<[2], [1], [1], [2], [0, 0, 0, 1, 1, 2], [0], [0]>} : vector<2x8x20xbf16>, vector<2x20x60xbf16>, vector<2x8x60xf32> -> vector<2x8x60xf32>
    "tpu.trace_stop"() : () -> ()
    %6 = vector.shape_cast %0 : vector<8x1xf32> to vector<1x8x1xf32>
    %7 = vector.broadcast %6 : vector<1x8x1xf32> to vector<2x8x60xf32>
    %8 = arith.addf %5, %7 : vector<2x8x60xf32>
    %cst_9 = arith.constant 0.000000e+00 : f32
    %9 = vector.broadcast %cst_9 : f32 to vector<2x8x60xf32>
    %10 = arith.maximumf %8, %9 : vector<2x8x60xf32>
    %cst_10 = arith.constant dense<0.000000e+00> : vector<2x8xf32>
    %11 = vector.multi_reduction <add>, %10, %cst_10 [2] : vector<2x8x60xf32> to vector<2x8xf32>
    %12 = vector.shape_cast %11 : vector<2x8xf32> to vector<2x8x1xf32>
    %cst_11 = arith.constant dense<0.000000e+00> : vector<8x1xf32>
    %13 = vector.multi_reduction <add>, %12, %cst_11 [0] : vector<2x8x1xf32> to vector<8x1xf32>
    %14 = vector.shape_cast %13 : vector<8x1xf32> to vector<1x8x1xf32>
    %15 = arith.mulf %10, %10 : vector<2x8x60xf32>
    %cst_12 = arith.constant dense<0.000000e+00> : vector<2x8xf32>
    %16 = vector.multi_reduction <add>, %15, %cst_12 [2] : vector<2x8x60xf32> to vector<2x8xf32>
    %17 = vector.shape_cast %16 : vector<2x8xf32> to vector<2x8x1xf32>
    %cst_13 = arith.constant dense<0.000000e+00> : vector<8x1xf32>
    %18 = vector.multi_reduction <add>, %17, %cst_13 [0] : vector<2x8x1xf32> to vector<8x1xf32>
    %19 = vector.shape_cast %18 : vector<8x1xf32> to vector<1x8x1xf32>
    %cst_14 = arith.constant 0.00833333377 : f32
    %20 = vector.broadcast %cst_14 : f32 to vector<1x8x1xf32>
    %21 = arith.mulf %14, %20 : vector<1x8x1xf32>
    %cst_15 = arith.constant 0.00833333377 : f32
    %22 = vector.broadcast %cst_15 : f32 to vector<1x8x1xf32>
    %23 = arith.mulf %19, %22 : vector<1x8x1xf32>
    %24 = arith.mulf %21, %21 : vector<1x8x1xf32>
    %25 = arith.subf %23, %24 : vector<1x8x1xf32>
    %26 = vector.broadcast %21 : vector<1x8x1xf32> to vector<2x8x60xf32>
    %27 = arith.subf %10, %26 : vector<2x8x60xf32>
    %cst_16 = arith.constant 9.99999974E-6 : f32
    %28 = vector.broadcast %cst_16 : f32 to vector<1x8x1xf32>
    %29 = arith.addf %25, %28 : vector<1x8x1xf32>
    %30 = math.rsqrt %29 : vector<1x8x1xf32>
    %31 = vector.shape_cast %1 : vector<8x1xf32> to vector<1x8x1xf32>
    %32 = arith.mulf %30, %31 : vector<1x8x1xf32>
    %33 = vector.broadcast %32 : vector<1x8x1xf32> to vector<2x8x60xf32>
    %34 = arith.mulf %27, %33 : vector<2x8x60xf32>
    %35 = vector.shape_cast %2 : vector<8x1xf32> to vector<1x8x1xf32>
    %36 = vector.broadcast %35 : vector<1x8x1xf32> to vector<2x8x60xf32>
    %37 = arith.addf %34, %36 : vector<2x8x60xf32>
    %38 = arith.truncf %37 : vector<2x8x60xf32> to vector<2x8x60xbf16>
    %c0_17 = arith.constant 0 : index
    %c0_18 = arith.constant 0 : index
    %39 = vector.load %arg5[%c0_17, %c0_18] : memref<16x5xf32, #tpu.memory_space<vmem>>, vector<16x1xf32>
    %c0_19 = arith.constant 0 : index
    %c1_20 = arith.constant 1 : index
    %40 = vector.load %arg5[%c0_19, %c1_20] : memref<16x5xf32, #tpu.memory_space<vmem>>, vector<16x1xf32>
    %c0_21 = arith.constant 0 : index
    %c2_22 = arith.constant 2 : index
    %41 = vector.load %arg5[%c0_21, %c2_22] : memref<16x5xf32, #tpu.memory_space<vmem>>, vector<16x1xf32>
    %c0_23 = arith.constant 0 : index
    %c0_24 = arith.constant 0 : index
    %c0_25 = arith.constant 0 : index
    %c0_26 = arith.constant 0 : index
    %42 = vector.load %arg3[%c0_23, %c0_24, %c0_25, %c0_26] : memref<3x2x60x17xbf16, #tpu.memory_space<vmem>>, vector<1x2x60x17xbf16>
    %43 = vector.shape_cast %42 : vector<1x2x60x17xbf16> to vector<2x60x17xbf16>
    "tpu.trace_start"() <{level = 10 : i32, message = "ncr,nrl->ncl"}> : () -> ()
    %cst_27 = arith.constant dense<0.000000e+00> : vector<2x8x17xf32>
    %44 = tpu.matmul %38, %43, %cst_27 {dimension_numbers = #tpu.dot_dimension_numbers<[2], [1], [1], [2], [0, 0, 0, 1, 1, 2], [0], [0]>} : vector<2x8x60xbf16>, vector<2x60x17xbf16>, vector<2x8x17xf32> -> vector<2x8x17xf32>
    "tpu.trace_stop"() : () -> ()
    %c0_28 = arith.constant 0 : index
    %c0_29 = arith.constant 0 : index
    %c0_30 = arith.constant 0 : index
    %c0_31 = arith.constant 0 : index
    %45 = vector.load %arg4[%c0_28, %c0_29, %c0_30, %c0_31] : memref<3x2x16x8xbf16, #tpu.memory_space<vmem>>, vector<1x2x16x8xbf16>
    %46 = vector.shape_cast %45 : vector<1x2x16x8xbf16> to vector<2x16x8xbf16>
    %47 = arith.truncf %44 : vector<2x8x17xf32> to vector<2x8x17xbf16>
    "tpu.trace_start"() <{level = 10 : i32, message = "ndc,ncl->ndl"}> : () -> ()
    %cst_32 = arith.constant dense<0.000000e+00> : vector<2x16x17xf32>
    %48 = tpu.matmul %46, %47, %cst_32 {dimension_numbers = #tpu.dot_dimension_numbers<[2], [1], [1], [2], [0, 0, 0, 1, 1, 2], [0], [0]>} : vector<2x16x8xbf16>, vector<2x8x17xbf16>, vector<2x16x17xf32> -> vector<2x16x17xf32>
    "tpu.trace_stop"() : () -> ()
    %c1_33 = arith.constant 1 : index
    %c0_34 = arith.constant 0 : index
    %c0_35 = arith.constant 0 : index
    %c0_36 = arith.constant 0 : index
    %49 = vector.load %arg3[%c1_33, %c0_34, %c0_35, %c0_36] : memref<3x2x60x17xbf16, #tpu.memory_space<vmem>>, vector<1x2x60x17xbf16>
    %50 = vector.shape_cast %49 : vector<1x2x60x17xbf16> to vector<2x60x17xbf16>
    "tpu.trace_start"() <{level = 10 : i32, message = "ncr,nrl->ncl"}> : () -> ()
    %cst_37 = arith.constant dense<0.000000e+00> : vector<2x8x17xf32>
    %51 = tpu.matmul %38, %50, %cst_37 {dimension_numbers = #tpu.dot_dimension_numbers<[2], [1], [1], [2], [0, 0, 0, 1, 1, 2], [0], [0]>} : vector<2x8x60xbf16>, vector<2x60x17xbf16>, vector<2x8x17xf32> -> vector<2x8x17xf32>
    "tpu.trace_stop"() : () -> ()
    %c1_38 = arith.constant 1 : index
    %c0_39 = arith.constant 0 : index
    %c0_40 = arith.constant 0 : index
    %c0_41 = arith.constant 0 : index
    %52 = vector.load %arg4[%c1_38, %c0_39, %c0_40, %c0_41] : memref<3x2x16x8xbf16, #tpu.memory_space<vmem>>, vector<1x2x16x8xbf16>
    %53 = vector.shape_cast %52 : vector<1x2x16x8xbf16> to vector<2x16x8xbf16>
    %54 = arith.truncf %51 : vector<2x8x17xf32> to vector<2x8x17xbf16>
    "tpu.trace_start"() <{level = 10 : i32, message = "ndc,ncl->ndl"}> : () -> ()
    %cst_42 = arith.constant dense<0.000000e+00> : vector<2x16x17xf32>
    %55 = tpu.matmul %53, %54, %cst_42 {dimension_numbers = #tpu.dot_dimension_numbers<[2], [1], [1], [2], [0, 0, 0, 1, 1, 2], [0], [0]>} : vector<2x16x8xbf16>, vector<2x8x17xbf16>, vector<2x16x17xf32> -> vector<2x16x17xf32>
    "tpu.trace_stop"() : () -> ()
    %56 = arith.addf %48, %55 : vector<2x16x17xf32>
    %c2_43 = arith.constant 2 : index
    %c0_44 = arith.constant 0 : index
    %c0_45 = arith.constant 0 : index
    %c0_46 = arith.constant 0 : index
    %57 = vector.load %arg3[%c2_43, %c0_44, %c0_45, %c0_46] : memref<3x2x60x17xbf16, #tpu.memory_space<vmem>>, vector<1x2x60x17xbf16>
    %58 = vector.shape_cast %57 : vector<1x2x60x17xbf16> to vector<2x60x17xbf16>
    "tpu.trace_start"() <{level = 10 : i32, message = "ncr,nrl->ncl"}> : () -> ()
    %cst_47 = arith.constant dense<0.000000e+00> : vector<2x8x17xf32>
    %59 = tpu.matmul %38, %58, %cst_47 {dimension_numbers = #tpu.dot_dimension_numbers<[2], [1], [1], [2], [0, 0, 0, 1, 1, 2], [0], [0]>} : vector<2x8x60xbf16>, vector<2x60x17xbf16>, vector<2x8x17xf32> -> vector<2x8x17xf32>
    "tpu.trace_stop"() : () -> ()
    %c2_48 = arith.constant 2 : index
    %c0_49 = arith.constant 0 : index
    %c0_50 = arith.constant 0 : index
    %c0_51 = arith.constant 0 : index
    %60 = vector.load %arg4[%c2_48, %c0_49, %c0_50, %c0_51] : memref<3x2x16x8xbf16, #tpu.memory_space<vmem>>, vector<1x2x16x8xbf16>
    %61 = vector.shape_cast %60 : vector<1x2x16x8xbf16> to vector<2x16x8xbf16>
    %62 = arith.truncf %59 : vector<2x8x17xf32> to vector<2x8x17xbf16>
    "tpu.trace_start"() <{level = 10 : i32, message = "ndc,ncl->ndl"}> : () -> ()
    %cst_52 = arith.constant dense<0.000000e+00> : vector<2x16x17xf32>
    %63 = tpu.matmul %61, %62, %cst_52 {dimension_numbers = #tpu.dot_dimension_numbers<[2], [1], [1], [2], [0, 0, 0, 1, 1, 2], [0], [0]>} : vector<2x16x8xbf16>, vector<2x8x17xbf16>, vector<2x16x17xf32> -> vector<2x16x17xf32>
    "tpu.trace_stop"() : () -> ()
    %64 = arith.addf %56, %63 : vector<2x16x17xf32>
    %65 = vector.shape_cast %39 : vector<16x1xf32> to vector<1x16x1xf32>
    %66 = vector.broadcast %65 : vector<1x16x1xf32> to vector<2x16x17xf32>
    %67 = arith.addf %64, %66 : vector<2x16x17xf32>
    %cst_53 = arith.constant 0.000000e+00 : f32
    %68 = vector.broadcast %cst_53 : f32 to vector<2x16x17xf32>
    %69 = arith.maximumf %67, %68 : vector<2x16x17xf32>
    %cst_54 = arith.constant dense<0.000000e+00> : vector<2x16xf32>
    %70 = vector.multi_reduction <add>, %69, %cst_54 [2] : vector<2x16x17xf32> to vector<2x16xf32>
    %71 = vector.shape_cast %70 : vector<2x16xf32> to vector<2x16x1xf32>
    %cst_55 = arith.constant dense<0.000000e+00> : vector<16x1xf32>
    %72 = vector.multi_reduction <add>, %71, %cst_55 [0] : vector<2x16x1xf32> to vector<16x1xf32>
    %73 = vector.shape_cast %72 : vector<16x1xf32> to vector<1x16x1xf32>
    %74 = arith.mulf %69, %69 : vector<2x16x17xf32>
    %cst_56 = arith.constant dense<0.000000e+00> : vector<2x16xf32>
    %75 = vector.multi_reduction <add>, %74, %cst_56 [2] : vector<2x16x17xf32> to vector<2x16xf32>
    %76 = vector.shape_cast %75 : vector<2x16xf32> to vector<2x16x1xf32>
    %cst_57 = arith.constant dense<0.000000e+00> : vector<16x1xf32>
    %77 = vector.multi_reduction <add>, %76, %cst_57 [0] : vector<2x16x1xf32> to vector<16x1xf32>
    %78 = vector.shape_cast %77 : vector<16x1xf32> to vector<1x16x1xf32>
    %cst_58 = arith.constant 0.0294117648 : f32
    %79 = vector.broadcast %cst_58 : f32 to vector<1x16x1xf32>
    %80 = arith.mulf %73, %79 : vector<1x16x1xf32>
    %cst_59 = arith.constant 0.0294117648 : f32
    %81 = vector.broadcast %cst_59 : f32 to vector<1x16x1xf32>
    %82 = arith.mulf %78, %81 : vector<1x16x1xf32>
    %83 = arith.mulf %80, %80 : vector<1x16x1xf32>
    %84 = arith.subf %82, %83 : vector<1x16x1xf32>
    %85 = vector.broadcast %80 : vector<1x16x1xf32> to vector<2x16x17xf32>
    %86 = arith.subf %69, %85 : vector<2x16x17xf32>
    %cst_60 = arith.constant 9.99999974E-6 : f32
    %87 = vector.broadcast %cst_60 : f32 to vector<1x16x1xf32>
    %88 = arith.addf %84, %87 : vector<1x16x1xf32>
    %89 = math.rsqrt %88 : vector<1x16x1xf32>
    %90 = vector.shape_cast %40 : vector<16x1xf32> to vector<1x16x1xf32>
    %91 = arith.mulf %89, %90 : vector<1x16x1xf32>
    %92 = vector.broadcast %91 : vector<1x16x1xf32> to vector<2x16x17xf32>
    %93 = arith.mulf %86, %92 : vector<2x16x17xf32>
    %94 = vector.shape_cast %41 : vector<16x1xf32> to vector<1x16x1xf32>
    %95 = vector.broadcast %94 : vector<1x16x1xf32> to vector<2x16x17xf32>
    %96 = arith.addf %93, %95 : vector<2x16x17xf32>
    %c0_61 = arith.constant 0 : index
    %c3 = arith.constant 3 : index
    %97 = vector.load %arg5[%c0_61, %c3] : memref<16x5xf32, #tpu.memory_space<vmem>>, vector<16x1xf32>
    %c0_62 = arith.constant 0 : index
    %c4 = arith.constant 4 : index
    %98 = vector.load %arg5[%c0_62, %c4] : memref<16x5xf32, #tpu.memory_space<vmem>>, vector<1x1xf32>
    %cst_63 = arith.constant dense<0.000000e+00> : vector<2x16xf32>
    %99 = vector.multi_reduction <add>, %96, %cst_63 [2] : vector<2x16x17xf32> to vector<2x16xf32>
    %100 = vector.shape_cast %99 : vector<2x16xf32> to vector<2x16x1xf32>
    %cst_64 = arith.constant 0.0588235296 : f32
    %101 = vector.broadcast %cst_64 : f32 to vector<2x16x1xf32>
    %102 = arith.mulf %100, %101 : vector<2x16x1xf32>
    %103 = vector.shape_cast %97 : vector<16x1xf32> to vector<1x16x1xf32>
    %104 = vector.broadcast %103 : vector<1x16x1xf32> to vector<2x16x1xf32>
    %105 = arith.mulf %102, %104 : vector<2x16x1xf32>
    %cst_65 = arith.constant dense<0.000000e+00> : vector<2x1xf32>
    %106 = vector.multi_reduction <add>, %105, %cst_65 [1] : vector<2x16x1xf32> to vector<2x1xf32>
    %107 = vector.shape_cast %106 : vector<2x1xf32> to vector<2x1x1xf32>
    %108 = vector.shape_cast %98 : vector<1x1xf32> to vector<1x1x1xf32>
    %109 = vector.broadcast %108 : vector<1x1x1xf32> to vector<2x1x1xf32>
    %110 = arith.addf %107, %109 : vector<2x1x1xf32>
    %c0_66 = arith.constant 0 : index
    %c0_67 = arith.constant 0 : index
    %c0_68 = arith.constant 0 : index
    %111 = vector.load %arg6[%c0_66, %c0_67, %c0_68] : memref<2x1x1xf32, #tpu.memory_space<vmem>>, vector<2x1x1xf32>
    tpu.vector_store %arg6[%c0_66, %c0_67, %c0_68], %110 {strides = array<i32>} : memref<2x1x1xf32, #tpu.memory_space<vmem>>, vector<2x1x1xf32>,
    return
  }
}

</mosaic_0001>

<llo_original>
// kernel: tpu_custom_call.1
$region0: #{tpu_custom_call.1}
  #allocation0 [shape = 'u32[]', space=smem, size = 0x4, offset = 0x4, fixed_abs, tag = 'smem constant byte address 0x4 - core index']
  #allocation1 [shape = 'u32[144,128]{1,0:T(1,128)}', space=vmem, size = 0x12000, scoped, tag = 'internal scratch']
  %s0 = inlined_call_operand.vmem [shape: bf16[2,20,60], index: 0, kind: input, shape index: {}]
  %s1 = inlined_call_operand.vmem [shape: bf16[2,8,20], index: 1, kind: input, shape index: {}]
  %s2 = inlined_call_operand.vmem [shape: f32[8,3], index: 2, kind: input, shape index: {}]
  %s3 = inlined_call_operand.vmem [shape: bf16[3,2,60,17], index: 3, kind: input, shape index: {}]
  %s4 = inlined_call_operand.vmem [shape: bf16[3,2,16,8], index: 4, kind: input, shape index: {}]
  %s5 = inlined_call_operand.vmem [shape: f32[16,5], index: 5, kind: input, shape index: {}]
  %s6 = inlined_call_operand.vmem [shape: f32[2,1,1], index: 6, kind: output, shape index: {}]
  %s7 = sld [smem:[#allocation0]]
  $region34: #{tpu_custom_call.1} parent=0
    _
  %s9 = ssub.s32 1, %s7
  %s10 = scalar_select 0, %s9, %s7
  // Predicated region
  $region2: #{tpu_custom_call.1} parent=0 // pred_check
    _
  $region3: #{tpu_custom_call.1} parent=0 // pred_check_branch
    %12 = sbr.rel (0) target = $region5
  $region4: #{tpu_custom_call.1} parent=0 // pred_region
    _
  $region5: #{tpu_custom_call.1} parent=0 // pred_fallthru
    _
  // Predicated region
  $region6: #{tpu_custom_call.1} parent=0 // pred_check
    _
  $region7: #{tpu_custom_call.1} parent=0 // pred_check_branch
    %14 = sbr.rel (0) target = $region9
  $region8: #{tpu_custom_call.1} parent=0 // pred_region
    _
  $region9: #{tpu_custom_call.1} parent=0 // pred_fallthru
    _
  // Predicated region
  $region10: #{tpu_custom_call.1} parent=0 // pred_check
    _
  $region11: #{tpu_custom_call.1} parent=0 // pred_check_branch
    %16 = sbr.rel (0) target = $region13
  $region12: #{tpu_custom_call.1} parent=0 // pred_region
    _
  $region13: #{tpu_custom_call.1} parent=0 // pred_fallthru
    _
  // Predicated region
  $region14: #{tpu_custom_call.1} parent=0 // pred_check
    _
  $region15: #{tpu_custom_call.1} parent=0 // pred_check_branch
    %18 = sbr.rel (0) target = $region17
  $region16: #{tpu_custom_call.1} parent=0 // pred_region
    _
  $region17: #{tpu_custom_call.1} parent=0 // pred_fallthru
    _
  // Predicated region
  $region18: #{tpu_custom_call.1} parent=0 // pred_check
    _
  $region19: #{tpu_custom_call.1} parent=0 // pred_check_branch
    %20 = sbr.rel (0) target = $region21
  $region20: #{tpu_custom_call.1} parent=0 // pred_region
    _
  $region21: #{tpu_custom_call.1} parent=0 // pred_fallthru
    _
  // Predicated region
  $region22: #{tpu_custom_call.1} parent=0 // pred_check
    _
  $region23: #{tpu_custom_call.1} parent=0 // pred_check_branch
    %22 = sbr.rel (0) target = $region25
  $region24: #{tpu_custom_call.1} parent=0 // pred_region
    _
  $region25: #{tpu_custom_call.1} parent=0 // pred_fallthru
    _
  %v24 = vld [vmem:[%s2] sm:$0xff]
  %v25 = vld [vmem:[%s1] sm:$0xf]
  %v26 = vld [vmem:[%s1 + $0x4] sm:$0xf]
  %v27 = vld [vmem:[%s0] sm:$0xf]
  %v28 = vld [vmem:[%s0 + $0x4] sm:$0xf]
  %v29 = vld [vmem:[%s0 + $0x8] sm:$0x3]
  %v30 = vld [vmem:[%s0 + $0xc] sm:$0xf]
  %v31 = vld [vmem:[%s0 + $0x10] sm:$0xf]
  %v32 = vld [vmem:[%s0 + $0x14] sm:$0x3]
  %34 = vset.pattern.permute.xlu0 0
  %35 = vperm.xlu0 %34, %v24
  %v36 = vpop.permute.xlu0 %35
  %v41 = vunpack.c.l.b16 %v27
  %v42 = vunpack.c.l.b16 %v28
  %v43 = vunpack.c.l.b16 %v29
  %v44 = vpack.c.b16 %v42, %v41
  %v45 = vpack.c.b16 %v43, %v43
  %vm47 = vcmask 162816
  %v49 = vsel %vm47, %v25, 0
  %vm51 = vcmask 1041408
  %v53 = vsel %vm51, %v45, 0
  %55 = vmatprep.subr.bf16.mxu0 0
  %56 = vmatpush1.bf16.msra.mxu0 0
  %57 = vmatprep.subr.bf16.mxu0 0
  %58 = vmatpush1.bf16.msra.mxu0 0
  %59 = vmatprep.subr.bf16.mxu0 0
  %60 = vmatpush1.bf16.msra.mxu0 0
  %61 = vmatprep.subr.bf16.mxu0 0
  %62 = vmatpush1.bf16.msra.mxu0 0
  %63 = vmatprep.subr.bf16.mxu0 0
  %64 = vmatpush1.bf16.msra.mxu0 0
  %65 = vmatprep.subr.bf16.mxu0 0
  %66 = vmatpush1.bf16.msra.mxu0 0
  %67 = vmatprep.subr.bf16.mxu0 0
  %68 = vmatpush1.bf16.msra.mxu0 %v53
  %69 = vmatprep.subr.bf16.mxu0 0
  %70 = vmatpush1.bf16.msra.mxu0 %v44
  %71 = vmatprep.subr.bf16.mxu0 0
  %72 = vmatpush2.bf16.msra.mxu0 0
  %73 = vmatprep.subr.bf16.mxu0 0
  %74 = vmatpush2.bf16.msra.mxu0 0
  %75 = vmatprep.subr.bf16.mxu0 0
  %76 = vmatpush2.bf16.msra.mxu0 0
  %77 = vmatprep.subr.bf16.mxu0 0
  %78 = vmatpush2.bf16.msra.mxu0 0
  %79 = vmatprep.subr.bf16.mxu0 0
  %80 = vmatpush2.bf16.msra.mxu0 0
  %81 = vmatprep.subr.bf16.mxu0 0
  %82 = vmatpush2.bf16.msra.mxu0 0
  %83 = vmatprep.subr.bf16.mxu0 0
  %84 = vmatpush2.bf16.msra.mxu0 0
  %85 = vmatprep.subr.bf16.mxu0 0
  %86 = vmatpush2.bf16.msra.mxu0 0
  %87 = vmatprep.mubr.bf16.mxu0 0
  %88 = vmatmul.mubr.bf16.gmra.mxu0 %v49
  %v89 = vpop.f32.mrf.mxu0
  %v90 = vadd.f32 %v36, %v89
  %v91 = vpop.f32.mrf.mxu0
  %v92 = vpop.f32.mrf.mxu0
  %v93 = vpop.f32.mrf.mxu0
  %94 = vdwg.mxu0
  %v98 = vunpack.c.l.b16 %v30
  %v99 = vunpack.c.l.b16 %v31
  %v100 = vunpack.c.l.b16 %v32
  %v101 = vpack.c.b16 %v99, %v98
  %v102 = vpack.c.b16 %v100, %v100
  %v105 = vsel %vm47, %v26, 0
  %v108 = vsel %vm51, %v102, 0
  %110 = vmatprep.subr.bf16.mxu0 0
  %111 = vmatpush1.bf16.msra.mxu0 0
  %112 = vmatprep.subr.bf16.mxu0 0
  %113 = vmatpush1.bf16.msra.mxu0 0
  %114 = vmatprep.subr.bf16.mxu0 0
  %115 = vmatpush1.bf16.msra.mxu0 0
  %116 = vmatprep.subr.bf16.mxu0 0
  %117 = vmatpush1.bf16.msra.mxu0 0
  %118 = vmatprep.subr.bf16.mxu0 0
  %119 = vmatpush1.bf16.msra.mxu0 0
  %120 = vmatprep.subr.bf16.mxu0 0
  %121 = vmatpush1.bf16.msra.mxu0 0
  %122 = vmatprep.subr.bf16.mxu0 0
  %123 = vmatpush1.bf16.msra.mxu0 %v108
  %124 = vmatprep.subr.bf16.mxu0 0
  %125 = vmatpush1.bf16.msra.mxu0 %v101
  %126 = vmatprep.subr.bf16.mxu0 0
  %127 = vmatpush2.bf16.msra.mxu0 0
  %128 = vmatprep.subr.bf16.mxu0 0
  %129 = vmatpush2.bf16.msra.mxu0 0
  %130 = vmatprep.subr.bf16.mxu0 0
  %131 = vmatpush2.bf16.msra.mxu0 0
  %132 = vmatprep.subr.bf16.mxu0 0
  %133 = vmatpush2.bf16.msra.mxu0 0
  %134 = vmatprep.subr.bf16.mxu0 0
  %135 = vmatpush2.bf16.msra.mxu0 0
  %136 = vmatprep.subr.bf16.mxu0 0
  %137 = vmatpush2.bf16.msra.mxu0 0
  %138 = vmatprep.subr.bf16.mxu0 0
  %139 = vmatpush2.bf16.msra.mxu0 0
  %140 = vmatprep.subr.bf16.mxu0 0
  %141 = vmatpush2.bf16.msra.mxu0 0
  %142 = vmatprep.mubr.bf16.mxu0 0
  %143 = vmatmul.mubr.bf16.gmra.mxu0 %v105
  %v144 = vpop.f32.mrf.mxu0
  %v145 = vadd.f32 %v36, %v144
  %v146 = vpop.f32.mrf.mxu0
  %v147 = vpop.f32.mrf.mxu0
  %v148 = vpop.f32.mrf.mxu0
  %149 = vdwg.mxu0
  %v150 = vmax.f32 %v90, 0.0
  %v151 = vmax.f32 %v145, 0.0
  %vm152 = vcmask 490496
  %v153 = vsel %vm152, %v150, 0.0
  %154 = vadd.xlane.f32.xlu0 %v153
  %v155 = vpop.xlane.xlu0 %154
  %v156 = vsel %vm152, %v151, 0.0
  %157 = vadd.xlane.f32.xlu0 %v156
  %v158 = vpop.xlane.xlu0 %157
  %v159 = vadd.f32 %v155, %v158
  %v160 = vmul.f32 %v150, %v150
  %v161 = vmul.f32 %v151, %v151
  %v162 = vsel %vm152, %v160, 0.0
  %163 = vadd.xlane.f32.xlu0 %v162
  %v164 = vpop.xlane.xlu0 %163
  %v165 = vsel %vm152, %v161, 0.0
  %166 = vadd.xlane.f32.xlu0 %v165
  %v167 = vpop.xlane.xlu0 %166
  %v168 = vadd.f32 %v164, %v167
  %v169 = vmul.f32 %v159, 0.008333334
  %v170 = vmul.f32 %v168, 0.008333334
  %v171 = vmul.f32 %v169, %v169
  %v172 = vsub.f32 %v170, %v171
  %v173 = vsub.f32 %v150, %v169
  %v174 = vsub.f32 %v151, %v169
  %v175 = vadd.f32 %v172, 1e-05
  %v176 = vrsqrt.pop %v175
  %v177 = vmul.f32 %v176, %v24
  %179 = vset.pattern.permute.xlu0 1
  %180 = vperm.xlu0 %179, %v177
  %v181 = vpop.permute.xlu0 %180
  %v183 = vmul.f32 %v173, %v181
  %v184 = vmul.f32 %v174, %v181
  %185 = vset.pattern.permute.xlu0 2
  %186 = vperm.xlu0 %185, %v24
  %v187 = vpop.permute.xlu0 %186
  %v189 = vadd.f32 %v183, %v187
  %v190 = vadd.f32 %v184, %v187
  %v191 = vpack.c.bf16 %v189, %v189
  %v192 = vpack.c.bf16 %v190, %v190
  %v193 = vld [vmem:[%s5] sm:$0xff]
  %v194 = vld [vmem:[%s5 + $0x8] sm:$0xff]
  %v195 = vld [vmem:[%s3] sm:$0xf]
  %v196 = vld [vmem:[%s3 + $0x4] sm:$0xf]
  %v197 = vld [vmem:[%s3 + $0x8] sm:$0xf]
  %v198 = vld [vmem:[%s3 + $0xc] sm:$0xf]
  %v199 = vld [vmem:[%s3 + $0x10] sm:$0xf]
  %v200 = vld [vmem:[%s3 + $0x14] sm:$0xf]
  %v201 = vld [vmem:[%s3 + $0x18] sm:$0xf]
  %v202 = vld [vmem:[%s3 + $0x1c] sm:$0x3]
  %v203 = vld [vmem:[%s3 + $0x20] sm:$0xf]
  %v204 = vld [vmem:[%s3 + $0x24] sm:$0xf]
  %v205 = vld [vmem:[%s3 + $0x28] sm:$0xf]
  %v206 = vld [vmem:[%s3 + $0x2c] sm:$0xf]
  %v207 = vld [vmem:[%s3 + $0x30] sm:$0xf]
  %v208 = vld [vmem:[%s3 + $0x34] sm:$0xf]
  %v209 = vld [vmem:[%s3 + $0x38] sm:$0xf]
  %v210 = vld [vmem:[%s3 + $0x3c] sm:$0x3]
  %v219 = vunpack.c.l.b16 %v195
  %v220 = vunpack.c.l.b16 %v196
  %v221 = vunpack.c.l.b16 %v197
  %v222 = vunpack.c.l.b16 %v198
  %v223 = vunpack.c.l.b16 %v199
  %v224 = vunpack.c.l.b16 %v200
  %v225 = vunpack.c.l.b16 %v201
  %v226 = vunpack.c.l.b16 %v202
  %v227 = vpack.c.b16 %v220, %v219
  %v228 = vpack.c.b16 %v222, %v221
  %v229 = vpack.c.b16 %v224, %v223
  %v230 = vpack.c.b16 %v226, %v225
  %v235 = vsel %vm152, %v191, 0
  %vm237 = vcmask 1045504
  %v239 = vsel %vm237, %v230, 0
  %241 = vmatprep.subr.bf16.mxu0 0
  %242 = vmatpush1.bf16.msra.mxu0 0
  %243 = vmatprep.subr.bf16.mxu0 0
  %244 = vmatpush1.bf16.msra.mxu0 0
  %245 = vmatprep.subr.bf16.mxu0 0
  %246 = vmatpush1.bf16.msra.mxu0 0
  %247 = vmatprep.subr.bf16.mxu0 0
  %248 = vmatpush1.bf16.msra.mxu0 0
  %249 = vmatprep.subr.bf16.mxu0 0
  %250 = vmatpush1.bf16.msra.mxu0 %v239
  %251 = vmatprep.subr.bf16.mxu0 0
  %252 = vmatpush1.bf16.msra.mxu0 %v229
  %253 = vmatprep.subr.bf16.mxu0 0
  %254 = vmatpush1.bf16.msra.mxu0 %v228
  %255 = vmatprep.subr.bf16.mxu0 0
  %256 = vmatpush1.bf16.msra.mxu0 %v227
  %257 = vmatprep.subr.bf16.mxu0 0
  %258 = vmatpush2.bf16.msra.mxu0 0
  %259 = vmatprep.subr.bf16.mxu0 0
  %260 = vmatpush2.bf16.msra.mxu0 0
  %261 = vmatprep.subr.bf16.mxu0 0
  %262 = vmatpush2.bf16.msra.mxu0 0
  %263 = vmatprep.subr.bf16.mxu0 0
  %264 = vmatpush2.bf16.msra.mxu0 0
  %265 = vmatprep.subr.bf16.mxu0 0
  %266 = vmatpush2.bf16.msra.mxu0 0
  %267 = vmatprep.subr.bf16.mxu0 0
  %268 = vmatpush2.bf16.msra.mxu0 0
  %269 = vmatprep.subr.bf16.mxu0 0
  %270 = vmatpush2.bf16.msra.mxu0 0
  %271 = vmatprep.subr.bf16.mxu0 0
  %272 = vmatpush2.bf16.msra.mxu0 0
  %273 = vmatprep.mubr.bf16.mxu0 0
  %274 = vmatmul.mubr.bf16.gmra.mxu0 %v235
  %v275 = vpop.f32.mrf.mxu0
  %v276 = vadd.f32 0.0, %v275
  %v277 = vpop.f32.mrf.mxu0
  %v278 = vpop.f32.mrf.mxu0
  %v279 = vpop.f32.mrf.mxu0
  %280 = vdwg.mxu0
  %v289 = vunpack.c.l.b16 %v203
  %v290 = vunpack.c.l.b16 %v204
  %v291 = vunpack.c.l.b16 %v205
  %v292 = vunpack.c.l.b16 %v206
  %v293 = vunpack.c.l.b16 %v207
  %v294 = vunpack.c.l.b16 %v208
  %v295 = vunpack.c.l.b16 %v209
  %v296 = vunpack.c.l.b16 %v210
  %v297 = vpack.c.b16 %v290, %v289
  %v298 = vpack.c.b16 %v292, %v291
  %v299 = vpack.c.b16 %v294, %v293
  %v300 = vpack.c.b16 %v296, %v295
  %v305 = vsel %vm152, %v192, 0
  %v308 = vsel %vm237, %v300, 0
  %310 = vmatprep.subr.bf16.mxu0 0
  %311 = vmatpush1.bf16.msra.mxu0 0
  %312 = vmatprep.subr.bf16.mxu0 0
  %313 = vmatpush1.bf16.msra.mxu0 0
  %314 = vmatprep.subr.bf16.mxu0 0
  %315 = vmatpush1.bf16.msra.mxu0 0
  %316 = vmatprep.subr.bf16.mxu0 0
  %317 = vmatpush1.bf16.msra.mxu0 0
  %318 = vmatprep.subr.bf16.mxu0 0
  %319 = vmatpush1.bf16.msra.mxu0 %v308
  %320 = vmatprep.subr.bf16.mxu0 0
  %321 = vmatpush1.bf16.msra.mxu0 %v299
  %322 = vmatprep.subr.bf16.mxu0 0
  %323 = vmatpush1.bf16.msra.mxu0 %v298
  %324 = vmatprep.subr.bf16.mxu0 0
  %325 = vmatpush1.bf16.msra.mxu0 %v297
  %326 = vmatprep.subr.bf16.mxu0 0
  %327 = vmatpush2.bf16.msra.mxu0 0
  %328 = vmatprep.subr.bf16.mxu0 0
  %329 = vmatpush2.bf16.msra.mxu0 0
  %330 = vmatprep.subr.bf16.mxu0 0
  %331 = vmatpush2.bf16.msra.mxu0 0
  %332 = vmatprep.subr.bf16.mxu0 0
  %333 = vmatpush2.bf16.msra.mxu0 0
  %334 = vmatprep.subr.bf16.mxu0 0
  %335 = vmatpush2.bf16.msra.mxu0 0
  %336 = vmatprep.subr.bf16.mxu0 0
  %337 = vmatpush2.bf16.msra.mxu0 0
  %338 = vmatprep.subr.bf16.mxu0 0
  %339 = vmatpush2.bf16.msra.mxu0 0
  %340 = vmatprep.subr.bf16.mxu0 0
  %341 = vmatpush2.bf16.msra.mxu0 0
  %342 = vmatprep.mubr.bf16.mxu0 0
  %343 = vmatmul.mubr.bf16.gmra.mxu0 %v305
  %v344 = vpop.f32.mrf.mxu0
  %v345 = vadd.f32 0.0, %v344
  %v346 = vpop.f32.mrf.mxu0
  %v347 = vpop.f32.mrf.mxu0
  %v348 = vpop.f32.mrf.mxu0
  %349 = vdwg.mxu0
  %v350 = vld [vmem:[%s4] sm:$0xf]
  %v351 = vld [vmem:[%s4 + $0x4] sm:$0xf]
  %v352 = vld [vmem:[%s4 + $0x8] sm:$0xf]
  %v353 = vld [vmem:[%s4 + $0xc] sm:$0xf]
  %v354 = vpack.c.bf16 %v276, %v276
  %v355 = vpack.c.bf16 %v345, %v345
  %s356 = scalar_lea.vmem %s3, 64
  %v357 = vld [vmem:[%s356] sm:$0xf]
  %v358 = vld [vmem:[%s356 + $0x4] sm:$0xf]
  %v359 = vld [vmem:[%s356 + $0x8] sm:$0xf]
  %v360 = vld [vmem:[%s356 + $0xc] sm:$0xf]
  %v361 = vld [vmem:[%s356 + $0x10] sm:$0xf]
  %v362 = vld [vmem:[%s356 + $0x14] sm:$0xf]
  %v363 = vld [vmem:[%s356 + $0x18] sm:$0xf]
  %v364 = vld [vmem:[%s356 + $0x1c] sm:$0x3]
  %v365 = vld [vmem:[%s356 + $0x20] sm:$0xf]
  %v366 = vld [vmem:[%s356 + $0x24] sm:$0xf]
  %v367 = vld [vmem:[%s356 + $0x28] sm:$0xf]
  %v368 = vld [vmem:[%s356 + $0x2c] sm:$0xf]
  %v369 = vld [vmem:[%s356 + $0x30] sm:$0xf]
  %v370 = vld [vmem:[%s356 + $0x34] sm:$0xf]
  %v371 = vld [vmem:[%s356 + $0x38] sm:$0xf]
  %v372 = vld [vmem:[%s356 + $0x3c] sm:$0x3]
  %v381 = vunpack.c.l.b16 %v357
  %v382 = vunpack.c.l.b16 %v358
  %v383 = vunpack.c.l.b16 %v359
  %v384 = vunpack.c.l.b16 %v360
  %v385 = vunpack.c.l.b16 %v361
  %v386 = vunpack.c.l.b16 %v362
  %v387 = vunpack.c.l.b16 %v363
  %v388 = vunpack.c.l.b16 %v364
  %v389 = vpack.c.b16 %v382, %v381
  %v390 = vpack.c.b16 %v384, %v383
  %v391 = vpack.c.b16 %v386, %v385
  %v392 = vpack.c.b16 %v388, %v387
  %v397 = vsel %vm237, %v392, 0
  %399 = vmatprep.subr.bf16.mxu0 0
  %400 = vmatpush1.bf16.msra.mxu0 0
  %401 = vmatprep.subr.bf16.mxu0 0
  %402 = vmatpush1.bf16.msra.mxu0 0
  %403 = vmatprep.subr.bf16.mxu0 0
  %404 = vmatpush1.bf16.msra.mxu0 0
  %405 = vmatprep.subr.bf16.mxu0 0
  %406 = vmatpush1.bf16.msra.mxu0 0
  %407 = vmatprep.subr.bf16.mxu0 0
  %408 = vmatpush1.bf16.msra.mxu0 %v397
  %409 = vmatprep.subr.bf16.mxu0 0
  %410 = vmatpush1.bf16.msra.mxu0 %v391
  %411 = vmatprep.subr.bf16.mxu0 0
  %412 = vmatpush1.bf16.msra.mxu0 %v390
  %413 = vmatprep.subr.bf16.mxu0 0
  %414 = vmatpush1.bf16.msra.mxu0 %v389
  %415 = vmatprep.subr.bf16.mxu0 0
  %416 = vmatpush2.bf16.msra.mxu0 0
  %417 = vmatprep.subr.bf16.mxu0 0
  %418 = vmatpush2.bf16.msra.mxu0 0
  %419 = vmatprep.subr.bf16.mxu0 0
  %420 = vmatpush2.bf16.msra.mxu0 0
  %421 = vmatprep.subr.bf16.mxu0 0
  %422 = vmatpush2.bf16.msra.mxu0 0
  %423 = vmatprep.subr.bf16.mxu0 0
  %424 = vmatpush2.bf16.msra.mxu0 0
  %425 = vmatprep.subr.bf16.mxu0 0
  %426 = vmatpush2.bf16.msra.mxu0 0
  %427 = vmatprep.subr.bf16.mxu0 0
  %428 = vmatpush2.bf16.msra.mxu0 0
  %429 = vmatprep.subr.bf16.mxu0 0
  %430 = vmatpush2.bf16.msra.mxu0 0
  %431 = vmatprep.mubr.bf16.mxu0 0
  %432 = vmatmul.mubr.bf16.gmra.mxu0 %v235
  %v433 = vpop.f32.mrf.mxu0
  %v434 = vadd.f32 0.0, %v433
  %v435 = vpop.f32.mrf.mxu0
  %v436 = vpop.f32.mrf.mxu0
  %v437 = vpop.f32.mrf.mxu0
  %438 = vdwg.mxu0
  %v447 = vunpack.c.l.b16 %v365
  %v448 = vunpack.c.l.b16 %v366
  %v449 = vunpack.c.l.b16 %v367
  %v450 = vunpack.c.l.b16 %v368
  %v451 = vunpack.c.l.b16 %v369
  %v452 = vunpack.c.l.b16 %v370
  %v453 = vunpack.c.l.b16 %v371
  %v454 = vunpack.c.l.b16 %v372
  %v455 = vpack.c.b16 %v448, %v447
  %v456 = vpack.c.b16 %v450, %v449
  %v457 = vpack.c.b16 %v452, %v451
  %v458 = vpack.c.b16 %v454, %v453
  %v463 = vsel %vm237, %v458, 0
  %465 = vmatprep.subr.bf16.mxu0 0
  %466 = vmatpush1.bf16.msra.mxu0 0
  %467 = vmatprep.subr.bf16.mxu0 0
  %468 = vmatpush1.bf16.msra.mxu0 0
  %469 = vmatprep.subr.bf16.mxu0 0
  %470 = vmatpush1.bf16.msra.mxu0 0
  %471 = vmatprep.subr.bf16.mxu0 0
  %472 = vmatpush1.bf16.msra.mxu0 0
  %473 = vmatprep.subr.bf16.mxu0 0
  %474 = vmatpush1.bf16.msra.mxu0 %v463
  %475 = vmatprep.subr.bf16.mxu0 0
  %476 = vmatpush1.bf16.msra.mxu0 %v457
  %477 = vmatprep.subr.bf16.mxu0 0
  %478 = vmatpush1.bf16.msra.mxu0 %v456
  %479 = vmatprep.subr.bf16.mxu0 0
  %480 = vmatpush1.bf16.msra.mxu0 %v455
  %481 = vmatprep.subr.bf16.mxu0 0
  %482 = vmatpush2.bf16.msra.mxu0 0
  %483 = vmatprep.subr.bf16.mxu0 0
  %484 = vmatpush2.bf16.msra.mxu0 0
  %485 = vmatprep.subr.bf16.mxu0 0
  %486 = vmatpush2.bf16.msra.mxu0 0
  %487 = vmatprep.subr.bf16.mxu0 0
  %488 = vmatpush2.bf16.msra.mxu0 0
  %489 = vmatprep.subr.bf16.mxu0 0
  %490 = vmatpush2.bf16.msra.mxu0 0
  %491 = vmatprep.subr.bf16.mxu0 0
  %492 = vmatpush2.bf16.msra.mxu0 0
  %493 = vmatprep.subr.bf16.mxu0 0
  %494 = vmatpush2.bf16.msra.mxu0 0
  %495 = vmatprep.subr.bf16.mxu0 0
  %496 = vmatpush2.bf16.msra.mxu0 0
  %497 = vmatprep.mubr.bf16.mxu0 0
  %498 = vmatmul.mubr.bf16.gmra.mxu0 %v305
  %v499 = vpop.f32.mrf.mxu0
  %v500 = vadd.f32 0.0, %v499
  %v501 = vpop.f32.mrf.mxu0
  %v502 = vpop.f32.mrf.mxu0
  %v503 = vpop.f32.mrf.mxu0
  %504 = vdwg.mxu0
  %s505 = scalar_lea.vmem %s4, 16
  %v506 = vld [vmem:[%s505] sm:$0xf]
  %v507 = vld [vmem:[%s505 + $0x4] sm:$0xf]
  %v508 = vld [vmem:[%s505 + $0x8] sm:$0xf]
  %v509 = vld [vmem:[%s505 + $0xc] sm:$0xf]
  %v510 = vpack.c.bf16 %v434, %v434
  %v511 = vpack.c.bf16 %v500, %v500
  %v514 = vunpack.c.l.b16 %v506
  %v515 = vunpack.c.l.b16 %v507
  %v516 = vpack.c.b16 %v515, %v514
  %vm517 = vcmask 64512
  %v519 = vsel %vm517, %v516, 0
  %vm521 = vcmask 1043456
  %v523 = vsel %vm521, %v510, 0
  %525 = vmatprep.subr.bf16.mxu0 0
  %526 = vmatpush1.bf16.msra.mxu0 0
  %527 = vmatprep.subr.bf16.mxu0 0
  %528 = vmatpush1.bf16.msra.mxu0 0
  %529 = vmatprep.subr.bf16.mxu0 0
  %530 = vmatpush1.bf16.msra.mxu0 0
  %531 = vmatprep.subr.bf16.mxu0 0
  %532 = vmatpush1.bf16.msra.mxu0 0
  %533 = vmatprep.subr.bf16.mxu0 0
  %534 = vmatpush1.bf16.msra.mxu0 0
  %535 = vmatprep.subr.bf16.mxu0 0
  %536 = vmatpush1.bf16.msra.mxu0 0
  %537 = vmatprep.subr.bf16.mxu0 0
  %538 = vmatpush1.bf16.msra.mxu0 0
  %539 = vmatprep.subr.bf16.mxu0 0
  %540 = vmatpush1.bf16.msra.mxu0 %v523
  %541 = vmatprep.subr.bf16.mxu0 0
  %542 = vmatpush2.bf16.msra.mxu0 0
  %543 = vmatprep.subr.bf16.mxu0 0
  %544 = vmatpush2.bf16.msra.mxu0 0
  %545 = vmatprep.subr.bf16.mxu0 0
  %546 = vmatpush2.bf16.msra.mxu0 0
  %547 = vmatprep.subr.bf16.mxu0 0
  %548 = vmatpush2.bf16.msra.mxu0 0
  %549 = vmatprep.subr.bf16.mxu0 0
  %550 = vmatpush2.bf16.msra.mxu0 0
  %551 = vmatprep.subr.bf16.mxu0 0
  %552 = vmatpush2.bf16.msra.mxu0 0
  %553 = vmatprep.subr.bf16.mxu0 0
  %554 = vmatpush2.bf16.msra.mxu0 0
  %555 = vmatprep.subr.bf16.mxu0 0
  %556 = vmatpush2.bf16.msra.mxu0 0
  %557 = vmatprep.mubr.bf16.mxu0 0
  %558 = vmatmul.mubr.bf16.gmra.mxu0 %v519
  %v559 = vpop.f32.mrf.mxu0
  %v560 = vadd.f32 0.0, %v559
  %v561 = vpop.f32.mrf.mxu0
  %v562 = vpop.f32.mrf.mxu0
  %v563 = vadd.f32 0.0, %v562
  %v564 = vpop.f32.mrf.mxu0
  %565 = vdwg.mxu0
  %v568 = vunpack.c.l.b16 %v508
  %v569 = vunpack.c.l.b16 %v509
  %v570 = vpack.c.b16 %v569, %v568
  %v572 = vsel %vm517, %v570, 0
  %v575 = vsel %vm521, %v511, 0
  %577 = vmatprep.subr.bf16.mxu0 0
  %578 = vmatpush1.bf16.msra.mxu0 0
  %579 = vmatprep.subr.bf16.mxu0 0
  %580 = vmatpush1.bf16.msra.mxu0 0
  %581 = vmatprep.subr.bf16.mxu0 0
  %582 = vmatpush1.bf16.msra.mxu0 0
  %583 = vmatprep.subr.bf16.mxu0 0
  %584 = vmatpush1.bf16.msra.mxu0 0
  %585 = vmatprep.subr.bf16.mxu0 0
  %586 = vmatpush1.bf16.msra.mxu0 0
  %587 = vmatprep.subr.bf16.mxu0 0
  %588 = vmatpush1.bf16.msra.mxu0 0
  %589 = vmatprep.subr.bf16.mxu0 0
  %590 = vmatpush1.bf16.msra.mxu0 0
  %591 = vmatprep.subr.bf16.mxu0 0
  %592 = vmatpush1.bf16.msra.mxu0 %v575
  %593 = vmatprep.subr.bf16.mxu0 0
  %594 = vmatpush2.bf16.msra.mxu0 0
  %595 = vmatprep.subr.bf16.mxu0 0
  %596 = vmatpush2.bf16.msra.mxu0 0
  %597 = vmatprep.subr.bf16.mxu0 0
  %598 = vmatpush2.bf16.msra.mxu0 0
  %599 = vmatprep.subr.bf16.mxu0 0
  %600 = vmatpush2.bf16.msra.mxu0 0
  %601 = vmatprep.subr.bf16.mxu0 0
  %602 = vmatpush2.bf16.msra.mxu0 0
  %603 = vmatprep.subr.bf16.mxu0 0
  %604 = vmatpush2.bf16.msra.mxu0 0
  %605 = vmatprep.subr.bf16.mxu0 0
  %606 = vmatpush2.bf16.msra.mxu0 0
  %607 = vmatprep.subr.bf16.mxu0 0
  %608 = vmatpush2.bf16.msra.mxu0 0
  %609 = vmatprep.mubr.bf16.mxu0 0
  %610 = vmatmul.mubr.bf16.gmra.mxu0 %v572
  %v611 = vpop.f32.mrf.mxu0
  %v612 = vadd.f32 0.0, %v611
  %v613 = vpop.f32.mrf.mxu0
  %v614 = vpop.f32.mrf.mxu0
  %v615 = vadd.f32 0.0, %v614
  %v616 = vpop.f32.mrf.mxu0
  %617 = vdwg.mxu0
  %v620 = vunpack.c.l.b16 %v350
  %v621 = vunpack.c.l.b16 %v351
  %v622 = vpack.c.b16 %v621, %v620
  %v624 = vsel %vm517, %v622, 0
  %v627 = vsel %vm521, %v354, 0
  %629 = vmatprep.subr.bf16.mxu0 0
  %630 = vmatpush1.bf16.msra.mxu0 0
  %631 = vmatprep.subr.bf16.mxu0 0
  %632 = vmatpush1.bf16.msra.mxu0 0
  %633 = vmatprep.subr.bf16.mxu0 0
  %634 = vmatpush1.bf16.msra.mxu0 0
  %635 = vmatprep.subr.bf16.mxu0 0
  %636 = vmatpush1.bf16.msra.mxu0 0
  %637 = vmatprep.subr.bf16.mxu0 0
  %638 = vmatpush1.bf16.msra.mxu0 0
  %639 = vmatprep.subr.bf16.mxu0 0
  %640 = vmatpush1.bf16.msra.mxu0 0
  %641 = vmatprep.subr.bf16.mxu0 0
  %642 = vmatpush1.bf16.msra.mxu0 0
  %643 = vmatprep.subr.bf16.mxu0 0
  %644 = vmatpush1.bf16.msra.mxu0 %v627
  %645 = vmatprep.subr.bf16.mxu0 0
  %646 = vmatpush2.bf16.msra.mxu0 0
  %647 = vmatprep.subr.bf16.mxu0 0
  %648 = vmatpush2.bf16.msra.mxu0 0
  %649 = vmatprep.subr.bf16.mxu0 0
  %650 = vmatpush2.bf16.msra.mxu0 0
  %651 = vmatprep.subr.bf16.mxu0 0
  %652 = vmatpush2.bf16.msra.mxu0 0
  %653 = vmatprep.subr.bf16.mxu0 0
  %654 = vmatpush2.bf16.msra.mxu0 0
  %655 = vmatprep.subr.bf16.mxu0 0
  %656 = vmatpush2.bf16.msra.mxu0 0
  %657 = vmatprep.subr.bf16.mxu0 0
  %658 = vmatpush2.bf16.msra.mxu0 0
  %659 = vmatprep.subr.bf16.mxu0 0
  %660 = vmatpush2.bf16.msra.mxu0 0
  %661 = vmatprep.mubr.bf16.mxu0 0
  %662 = vmatmul.mubr.bf16.gmra.mxu0 %v624
  %v663 = vpop.f32.mrf.mxu0
  %v664 = vadd.f32 %v560, %v663
  %v665 = vpop.f32.mrf.mxu0
  %v666 = vpop.f32.mrf.mxu0
  %v667 = vadd.f32 %v563, %v666
  %v668 = vpop.f32.mrf.mxu0
  %669 = vdwg.mxu0
  %v672 = vunpack.c.l.b16 %v352
  %v673 = vunpack.c.l.b16 %v353
  %v674 = vpack.c.b16 %v673, %v672
  %v676 = vsel %vm517, %v674, 0
  %v679 = vsel %vm521, %v355, 0
  %681 = vmatprep.subr.bf16.mxu0 0
  %682 = vmatpush1.bf16.msra.mxu0 0
  %683 = vmatprep.subr.bf16.mxu0 0
  %684 = vmatpush1.bf16.msra.mxu0 0
  %685 = vmatprep.subr.bf16.mxu0 0
  %686 = vmatpush1.bf16.msra.mxu0 0
  %687 = vmatprep.subr.bf16.mxu0 0
  %688 = vmatpush1.bf16.msra.mxu0 0
  %689 = vmatprep.subr.bf16.mxu0 0
  %690 = vmatpush1.bf16.msra.mxu0 0
  %691 = vmatprep.subr.bf16.mxu0 0
  %692 = vmatpush1.bf16.msra.mxu0 0
  %693 = vmatprep.subr.bf16.mxu0 0
  %694 = vmatpush1.bf16.msra.mxu0 0
  %695 = vmatprep.subr.bf16.mxu0 0
  %696 = vmatpush1.bf16.msra.mxu0 %v679
  %697 = vmatprep.subr.bf16.mxu0 0
  %698 = vmatpush2.bf16.msra.mxu0 0
  %699 = vmatprep.subr.bf16.mxu0 0
  %700 = vmatpush2.bf16.msra.mxu0 0
  %701 = vmatprep.subr.bf16.mxu0 0
  %702 = vmatpush2.bf16.msra.mxu0 0
  %703 = vmatprep.subr.bf16.mxu0 0
  %704 = vmatpush2.bf16.msra.mxu0 0
  %705 = vmatprep.subr.bf16.mxu0 0
  %706 = vmatpush2.bf16.msra.mxu0 0
  %707 = vmatprep.subr.bf16.mxu0 0
  %708 = vmatpush2.bf16.msra.mxu0 0
  %709 = vmatprep.subr.bf16.mxu0 0
  %710 = vmatpush2.bf16.msra.mxu0 0
  %711 = vmatprep.subr.bf16.mxu0 0
  %712 = vmatpush2.bf16.msra.mxu0 0
  %713 = vmatprep.mubr.bf16.mxu0 0
  %714 = vmatmul.mubr.bf16.gmra.mxu0 %v676
  %v715 = vpop.f32.mrf.mxu0
  %v716 = vadd.f32 %v612, %v715
  %v717 = vpop.f32.mrf.mxu0
  %v718 = vpop.f32.mrf.mxu0
  %v719 = vadd.f32 %v615, %v718
  %v720 = vpop.f32.mrf.mxu0
  %721 = vdwg.mxu0
  %s722 = scalar_lea.vmem %s3, 128
  %v723 = vld [vmem:[%s722] sm:$0xf]
  %v724 = vld [vmem:[%s722 + $0x4] sm:$0xf]
  %v725 = vld [vmem:[%s722 + $0x8] sm:$0xf]
  %v726 = vld [vmem:[%s722 + $0xc] sm:$0xf]
  %v727 = vld [vmem:[%s722 + $0x10] sm:$0xf]
  %v728 = vld [vmem:[%s722 + $0x14] sm:$0xf]
  %v729 = vld [vmem:[%s722 + $0x18] sm:$0xf]
  %v730 = vld [vmem:[%s722 + $0x1c] sm:$0x3]
  %v731 = vld [vmem:[%s722 + $0x20] sm:$0xf]
  %v732 = vld [vmem:[%s722 + $0x24] sm:$0xf]
  %v733 = vld [vmem:[%s722 + $0x28] sm:$0xf]
  %v734 = vld [vmem:[%s722 + $0x2c] sm:$0xf]
  %v735 = vld [vmem:[%s722 + $0x30] sm:$0xf]
  %v736 = vld [vmem:[%s722 + $0x34] sm:$0xf]
  %v737 = vld [vmem:[%s722 + $0x38] sm:$0xf]
  %v738 = vld [vmem:[%s722 + $0x3c] sm:$0x3]
  %v747 = vunpack.c.l.b16 %v723
  %v748 = vunpack.c.l.b16 %v724
  %v749 = vunpack.c.l.b16 %v725
  %v750 = vunpack.c.l.b16 %v726
  %v751 = vunpack.c.l.b16 %v727
  %v752 = vunpack.c.l.b16 %v728
  %v753 = vunpack.c.l.b16 %v729
  %v754 = vunpack.c.l.b16 %v730
  %v755 = vpack.c.b16 %v748, %v747
  %v756 = vpack.c.b16 %v750, %v749
  %v757 = vpack.c.b16 %v752, %v751
  %v758 = vpack.c.b16 %v754, %v753
  %v763 = vsel %vm237, %v758, 0
  %765 = vmatprep.subr.bf16.mxu0 0
  %766 = vmatpush1.bf16.msra.mxu0 0
  %767 = vmatprep.subr.bf16.mxu0 0
  %768 = vmatpush1.bf16.msra.mxu0 0
  %769 = vmatprep.subr.bf16.mxu0 0
  %770 = vmatpush1.bf16.msra.mxu0 0
  %771 = vmatprep.subr.bf16.mxu0 0
  %772 = vmatpush1.bf16.msra.mxu0 0
  %773 = vmatprep.subr.bf16.mxu0 0
  %774 = vmatpush1.bf16.msra.mxu0 %v763
  %775 = vmatprep.subr.bf16.mxu0 0
  %776 = vmatpush1.bf16.msra.mxu0 %v757
  %777 = vmatprep.subr.bf16.mxu0 0
  %778 = vmatpush1.bf16.msra.mxu0 %v756
  %779 = vmatprep.subr.bf16.mxu0 0
  %780 = vmatpush1.bf16.msra.mxu0 %v755
  %781 = vmatprep.subr.bf16.mxu0 0
  %782 = vmatpush2.bf16.msra.mxu0 0
  %783 = vmatprep.subr.bf16.mxu0 0
  %784 = vmatpush2.bf16.msra.mxu0 0
  %785 = vmatprep.subr.bf16.mxu0 0
  %786 = vmatpush2.bf16.msra.mxu0 0
  %787 = vmatprep.subr.bf16.mxu0 0
  %788 = vmatpush2.bf16.msra.mxu0 0
  %789 = vmatprep.subr.bf16.mxu0 0
  %790 = vmatpush2.bf16.msra.mxu0 0
  %791 = vmatprep.subr.bf16.mxu0 0
  %792 = vmatpush2.bf16.msra.mxu0 0
  %793 = vmatprep.subr.bf16.mxu0 0
  %794 = vmatpush2.bf16.msra.mxu0 0
  %795 = vmatprep.subr.bf16.mxu0 0
  %796 = vmatpush2.bf16.msra.mxu0 0
  %797 = vmatprep.mubr.bf16.mxu0 0
  %798 = vmatmul.mubr.bf16.gmra.mxu0 %v235
  %v799 = vpop.f32.mrf.mxu0
  %v800 = vadd.f32 0.0, %v799
  %v801 = vpop.f32.mrf.mxu0
  %v802 = vpop.f32.mrf.mxu0
  %v803 = vpop.f32.mrf.mxu0
  %804 = vdwg.mxu0
  %v813 = vunpack.c.l.b16 %v731
  %v814 = vunpack.c.l.b16 %v732
  %v815 = vunpack.c.l.b16 %v733
  %v816 = vunpack.c.l.b16 %v734
  %v817 = vunpack.c.l.b16 %v735
  %v818 = vunpack.c.l.b16 %v736
  %v819 = vunpack.c.l.b16 %v737
  %v820 = vunpack.c.l.b16 %v738
  %v821 = vpack.c.b16 %v814, %v813
  %v822 = vpack.c.b16 %v816, %v815
  %v823 = vpack.c.b16 %v818, %v817
  %v824 = vpack.c.b16 %v820, %v819
  %v829 = vsel %vm237, %v824, 0
  %831 = vmatprep.subr.bf16.mxu0 0
  %832 = vmatpush1.bf16.msra.mxu0 0
  %833 = vmatprep.subr.bf16.mxu0 0
  %834 = vmatpush1.bf16.msra.mxu0 0
  %835 = vmatprep.subr.bf16.mxu0 0
  %836 = vmatpush1.bf16.msra.mxu0 0
  %837 = vmatprep.subr.bf16.mxu0 0
  %838 = vmatpush1.bf16.msra.mxu0 0
  %839 = vmatprep.subr.bf16.mxu0 0
  %840 = vmatpush1.bf16.msra.mxu0 %v829
  %841 = vmatprep.subr.bf16.mxu0 0
  %842 = vmatpush1.bf16.msra.mxu0 %v823
  %843 = vmatprep.subr.bf16.mxu0 0
  %844 = vmatpush1.bf16.msra.mxu0 %v822
  %845 = vmatprep.subr.bf16.mxu0 0
  %846 = vmatpush1.bf16.msra.mxu0 %v821
  %847 = vmatprep.subr.bf16.mxu0 0
  %848 = vmatpush2.bf16.msra.mxu0 0
  %849 = vmatprep.subr.bf16.mxu0 0
  %850 = vmatpush2.bf16.msra.mxu0 0
  %851 = vmatprep.subr.bf16.mxu0 0
  %852 = vmatpush2.bf16.msra.mxu0 0
  %853 = vmatprep.subr.bf16.mxu0 0
  %854 = vmatpush2.bf16.msra.mxu0 0
  %855 = vmatprep.subr.bf16.mxu0 0
  %856 = vmatpush2.bf16.msra.mxu0 0
  %857 = vmatprep.subr.bf16.mxu0 0
  %858 = vmatpush2.bf16.msra.mxu0 0
  %859 = vmatprep.subr.bf16.mxu0 0
  %860 = vmatpush2.bf16.msra.mxu0 0
  %861 = vmatprep.subr.bf16.mxu0 0
  %862 = vmatpush2.bf16.msra.mxu0 0
  %863 = vmatprep.mubr.bf16.mxu0 0
  %864 = vmatmul.mubr.bf16.gmra.mxu0 %v305
  %v865 = vpop.f32.mrf.mxu0
  %v866 = vadd.f32 0.0, %v865
  %v867 = vpop.f32.mrf.mxu0
  %v868 = vpop.f32.mrf.mxu0
  %v869 = vpop.f32.mrf.mxu0
  %870 = vdwg.mxu0
  %s871 = scalar_lea.vmem %s4, 32
  %v872 = vld [vmem:[%s871] sm:$0xf]
  %v873 = vld [vmem:[%s871 + $0x4] sm:$0xf]
  %v874 = vld [vmem:[%s871 + $0x8] sm:$0xf]
  %v875 = vld [vmem:[%s871 + $0xc] sm:$0xf]
  %v876 = vpack.c.bf16 %v800, %v800
  %v877 = vpack.c.bf16 %v866, %v866
  %v880 = vunpack.c.l.b16 %v872
  %v881 = vunpack.c.l.b16 %v873
  %v882 = vpack.c.b16 %v881, %v880
  %v884 = vsel %vm517, %v882, 0
  %v887 = vsel %vm521, %v876, 0
  %889 = vmatprep.subr.bf16.mxu0 0
  %890 = vmatpush1.bf16.msra.mxu0 0
  %891 = vmatprep.subr.bf16.mxu0 0
  %892 = vmatpush1.bf16.msra.mxu0 0
  %893 = vmatprep.subr.bf16.mxu0 0
  %894 = vmatpush1.bf16.msra.mxu0 0
  %895 = vmatprep.subr.bf16.mxu0 0
  %896 = vmatpush1.bf16.msra.mxu0 0
  %897 = vmatprep.subr.bf16.mxu0 0
  %898 = vmatpush1.bf16.msra.mxu0 0
  %899 = vmatprep.subr.bf16.mxu0 0
  %900 = vmatpush1.bf16.msra.mxu0 0
  %901 = vmatprep.subr.bf16.mxu0 0
  %902 = vmatpush1.bf16.msra.mxu0 0
  %903 = vmatprep.subr.bf16.mxu0 0
  %904 = vmatpush1.bf16.msra.mxu0 %v887
  %905 = vmatprep.subr.bf16.mxu0 0
  %906 = vmatpush2.bf16.msra.mxu0 0
  %907 = vmatprep.subr.bf16.mxu0 0
  %908 = vmatpush2.bf16.msra.mxu0 0
  %909 = vmatprep.subr.bf16.mxu0 0
  %910 = vmatpush2.bf16.msra.mxu0 0
  %911 = vmatprep.subr.bf16.mxu0 0
  %912 = vmatpush2.bf16.msra.mxu0 0
  %913 = vmatprep.subr.bf16.mxu0 0
  %914 = vmatpush2.bf16.msra.mxu0 0
  %915 = vmatprep.subr.bf16.mxu0 0
  %916 = vmatpush2.bf16.msra.mxu0 0
  %917 = vmatprep.subr.bf16.mxu0 0
  %918 = vmatpush2.bf16.msra.mxu0 0
  %919 = vmatprep.subr.bf16.mxu0 0
  %920 = vmatpush2.bf16.msra.mxu0 0
  %921 = vmatprep.mubr.bf16.mxu0 0
  %922 = vmatmul.mubr.bf16.gmra.mxu0 %v884
  %v923 = vpop.f32.mrf.mxu0
  %v924 = vadd.f32 0.0, %v923
  %v925 = vpop.f32.mrf.mxu0
  %v926 = vpop.f32.mrf.mxu0
  %v927 = vadd.f32 0.0, %v926
  %v928 = vpop.f32.mrf.mxu0
  %929 = vdwg.mxu0
  %v932 = vunpack.c.l.b16 %v874
  %v933 = vunpack.c.l.b16 %v875
  %v934 = vpack.c.b16 %v933, %v932
  %v936 = vsel %vm517, %v934, 0
  %v939 = vsel %vm521, %v877, 0
  %941 = vmatprep.subr.bf16.mxu0 0
  %942 = vmatpush1.bf16.msra.mxu0 0
  %943 = vmatprep.subr.bf16.mxu0 0
  %944 = vmatpush1.bf16.msra.mxu0 0
  %945 = vmatprep.subr.bf16.mxu0 0
  %946 = vmatpush1.bf16.msra.mxu0 0
  %947 = vmatprep.subr.bf16.mxu0 0
  %948 = vmatpush1.bf16.msra.mxu0 0
  %949 = vmatprep.subr.bf16.mxu0 0
  %950 = vmatpush1.bf16.msra.mxu0 0
  %951 = vmatprep.subr.bf16.mxu0 0
  %952 = vmatpush1.bf16.msra.mxu0 0
  %953 = vmatprep.subr.bf16.mxu0 0
  %954 = vmatpush1.bf16.msra.mxu0 0
  %955 = vmatprep.subr.bf16.mxu0 0
  %956 = vmatpush1.bf16.msra.mxu0 %v939
  %957 = vmatprep.subr.bf16.mxu0 0
  %958 = vmatpush2.bf16.msra.mxu0 0
  %959 = vmatprep.subr.bf16.mxu0 0
  %960 = vmatpush2.bf16.msra.mxu0 0
  %961 = vmatprep.subr.bf16.mxu0 0
  %962 = vmatpush2.bf16.msra.mxu0 0
  %963 = vmatprep.subr.bf16.mxu0 0
  %964 = vmatpush2.bf16.msra.mxu0 0
  %965 = vmatprep.subr.bf16.mxu0 0
  %966 = vmatpush2.bf16.msra.mxu0 0
  %967 = vmatprep.subr.bf16.mxu0 0
  %968 = vmatpush2.bf16.msra.mxu0 0
  %969 = vmatprep.subr.bf16.mxu0 0
  %970 = vmatpush2.bf16.msra.mxu0 0
  %971 = vmatprep.subr.bf16.mxu0 0
  %972 = vmatpush2.bf16.msra.mxu0 0
  %973 = vmatprep.mubr.bf16.mxu0 0
  %974 = vmatmul.mubr.bf16.gmra.mxu0 %v936
  %v975 = vpop.f32.mrf.mxu0
  %v976 = vadd.f32 0.0, %v975
  %v977 = vpop.f32.mrf.mxu0
  %v978 = vpop.f32.mrf.mxu0
  %v979 = vadd.f32 0.0, %v978
  %v980 = vpop.f32.mrf.mxu0
  %981 = vdwg.mxu0
  %v982 = vadd.f32 %v664, %v924
  %v983 = vadd.f32 %v667, %v927
  %v984 = vadd.f32 %v716, %v976
  %v985 = vadd.f32 %v719, %v979
  %987 = vset.pattern.permute.xlu0 0
  %988 = vperm.xlu0 %987, %v193
  %v989 = vpop.permute.xlu0 %988
  %992 = vset.pattern.permute.xlu0 0
  %993 = vperm.xlu0 %992, %v194
  %v994 = vpop.permute.xlu0 %993
  %v996 = vadd.f32 %v982, %v989
  %v997 = vadd.f32 %v983, %v994
  %v998 = vadd.f32 %v984, %v989
  %v999 = vadd.f32 %v985, %v994
  %v1000 = vmax.f32 %v996, 0.0
  %v1001 = vmax.f32 %v997, 0.0
  %v1002 = vmax.f32 %v998, 0.0
  %v1003 = vmax.f32 %v999, 0.0
  %vm1004 = vcmask 138240
  %v1005 = vsel %vm1004, %v1000, 0.0
  %1006 = vadd.xlane.f32.xlu0 %v1005
  %v1007 = vpop.xlane.xlu0 %1006
  %v1008 = vsel %vm1004, %v1001, 0.0
  %1009 = vadd.xlane.f32.xlu0 %v1008
  %v1010 = vpop.xlane.xlu0 %1009
  %v1011 = vsel %vm1004, %v1002, 0.0
  %1012 = vadd.xlane.f32.xlu0 %v1011
  %v1013 = vpop.xlane.xlu0 %1012
  %v1014 = vsel %vm1004, %v1003, 0.0
  %1015 = vadd.xlane.f32.xlu0 %v1014
  %v1016 = vpop.xlane.xlu0 %1015
  %v1017 = vadd.f32 %v1007, %v1013
  %v1018 = vadd.f32 %v1010, %v1016
  %v1019 = vmul.f32 %v1000, %v1000
  %v1020 = vmul.f32 %v1001, %v1001
  %v1021 = vmul.f32 %v1002, %v1002
  %v1022 = vmul.f32 %v1003, %v1003
  %v1023 = vsel %vm1004, %v1019, 0.0
  %1024 = vadd.xlane.f32.xlu0 %v1023
  %v1025 = vpop.xlane.xlu0 %1024
  %v1026 = vsel %vm1004, %v1020, 0.0
  %1027 = vadd.xlane.f32.xlu0 %v1026
  %v1028 = vpop.xlane.xlu0 %1027
  %v1029 = vsel %vm1004, %v1021, 0.0
  %1030 = vadd.xlane.f32.xlu0 %v1029
  %v1031 = vpop.xlane.xlu0 %1030
  %v1032 = vsel %vm1004, %v1022, 0.0
  %1033 = vadd.xlane.f32.xlu0 %v1032
  %v1034 = vpop.xlane.xlu0 %1033
  %v1035 = vadd.f32 %v1025, %v1031
  %v1036 = vadd.f32 %v1028, %v1034
  %v1037 = vmul.f32 %v1017, 0.029411765
  %v1038 = vmul.f32 %v1018, 0.029411765
  %v1039 = vmul.f32 %v1035, 0.029411765
  %v1040 = vmul.f32 %v1036, 0.029411765
  %v1041 = vmul.f32 %v1037, %v1037
  %v1042 = vmul.f32 %v1038, %v1038
  %v1043 = vsub.f32 %v1039, %v1041
  %v1044 = vsub.f32 %v1040, %v1042
  %v1045 = vsub.f32 %v1000, %v1037
  %v1046 = vsub.f32 %v1001, %v1038
  %v1047 = vsub.f32 %v1002, %v1037
  %v1048 = vsub.f32 %v1003, %v1038
  %v1049 = vadd.f32 %v1043, 1e-05
  %v1050 = vadd.f32 %v1044, 1e-05
  %v1051 = vrsqrt.pop %v1049
  %v1052 = vrsqrt.pop %v1050
  %v1053 = vmul.f32 %v1051, %v193
  %v1054 = vmul.f32 %v1052, %v194
  %1056 = vset.pattern.permute.xlu0 1
  %1057 = vperm.xlu0 %1056, %v1053
  %v1058 = vpop.permute.xlu0 %1057
  %1061 = vset.pattern.permute.xlu0 1
  %1062 = vperm.xlu0 %1061, %v1054
  %v1063 = vpop.permute.xlu0 %1062
  %v1065 = vmul.f32 %v1045, %v1058
  %v1066 = vmul.f32 %v1046, %v1063
  %v1067 = vmul.f32 %v1047, %v1058
  %v1068 = vmul.f32 %v1048, %v1063
  %1069 = vset.pattern.permute.xlu0 2
  %1070 = vperm.xlu0 %1069, %v193
  %v1071 = vpop.permute.xlu0 %1070
  %1073 = vset.pattern.permute.xlu0 2
  %1074 = vperm.xlu0 %1073, %v194
  %v1075 = vpop.permute.xlu0 %1074
  %v1077 = vadd.f32 %v1065, %v1071
  %v1078 = vadd.f32 %v1066, %v1075
  %v1079 = vadd.f32 %v1067, %v1071
  %v1080 = vadd.f32 %v1068, %v1075
  %v1081 = vld [vmem:[%s5] sm:$0xff]
  %v1082 = vld [vmem:[%s5 + $0x8] sm:$0xff]
  %v1083 = vld [vmem:[%s5] sm:$0x1]
  %v1084 = vsel %vm1004, %v1077, 0.0
  %1085 = vadd.xlane.f32.xlu0 %v1084
  %v1086 = vpop.xlane.xlu0 %1085
  %v1087 = vsel %vm1004, %v1078, 0.0
  %1088 = vadd.xlane.f32.xlu0 %v1087
  %v1089 = vpop.xlane.xlu0 %1088
  %v1090 = vsel %vm1004, %v1079, 0.0
  %1091 = vadd.xlane.f32.xlu0 %v1090
  %v1092 = vpop.xlane.xlu0 %1091
  %v1093 = vsel %vm1004, %v1080, 0.0
  %1094 = vadd.xlane.f32.xlu0 %v1093
  %v1095 = vpop.xlane.xlu0 %1094
  %v1096 = vmul.f32 %v1086, 0.05882353
  %v1097 = vmul.f32 %v1089, 0.05882353
  %v1098 = vmul.f32 %v1092, 0.05882353
  %v1099 = vmul.f32 %v1095, 0.05882353
  %v1100 = vmul.f32 %v1096, %v1081
  %v1101 = vmul.f32 %v1097, %v1082
  %v1102 = vmul.f32 %v1098, %v1081
  %v1103 = vmul.f32 %v1099, %v1082
  %vm1104 = vcmask 31768
  %v1105 = vsel %vm1104, %v1100, 0.0
  %v1106 = vsel %vm1104, %v1101, 0.0
  %v1107 = vadd.f32 %v1105, %v1106
  %v1108 = vrot.slane %v1107, 4
  %v1109 = vadd.f32 %v1107, %v1108
  %v1110 = vrot.slane %v1109, 2
  %v1111 = vadd.f32 %v1109, %v1110
  %v1112 = vrot.slane %v1111, 1
  %v1113 = vadd.f32 %v1111, %v1112
  %v1114 = vsel %vm1104, %v1102, 0.0
  %v1115 = vsel %vm1104, %v1103, 0.0
  %v1116 = vadd.f32 %v1114, %v1115
  %v1117 = vrot.slane %v1116, 4
  %v1118 = vadd.f32 %v1116, %v1117
  %v1119 = vrot.slane %v1118, 2
  %v1120 = vadd.f32 %v1118, %v1119
  %v1121 = vrot.slane %v1120, 1
  %v1122 = vadd.f32 %v1120, %v1121
  %1124 = vrot.lane.b32.xlu0 %v1083, 127
  %v1125 = vpop.permute.xlu0 %1124
  %v1127 = vadd.f32 %v1113, %v1125
  %v1128 = vadd.f32 %v1122, %v1125
  %1131 = vrot.lane.b32.xlu0 %v1127, 125
  %v1132 = vpop.permute.xlu0 %1131
  %1133 = vrot.lane.b32.xlu0 %v1128, 125
  %v1134 = vpop.permute.xlu0 %1133
  %vm1137 = vcmask 0
  %1138 = vst.msk [vmem:[%s6] sm:$0x1] %vm1137, %v1132
  %1139 = vst.msk [vmem:[%s6 + $0x1] sm:$0x1] %vm1137, %v1134
  // Predicated region
  $region26: #{tpu_custom_call.1} parent=0 // pred_check
    _
  $region27: #{tpu_custom_call.1} parent=0 // pred_check_branch
    %1141 = sbr.rel (0) target = $region29
  $region28: #{tpu_custom_call.1} parent=0 // pred_region
    _
  $region29: #{tpu_custom_call.1} parent=0 // pred_fallthru
    _
  // Predicated region
  $region30: #{tpu_custom_call.1} parent=0 // pred_check
    _
  $region31: #{tpu_custom_call.1} parent=0 // pred_check_branch
    %1143 = sbr.rel (0) target = $region33
  $region32: #{tpu_custom_call.1} parent=0 // pred_region
    _
  $region33: #{tpu_custom_call.1} parent=0 // pred_fallthru
    _

</llo_original>
